<compile_context>
chip_gen: v5e
topology: v5e:2x2
jax: 0.10.0
libtpu: 0.0.40
codegen_flags: <defaults>
</compile_context>

<pallas_src>
import functools

import jax
import jax.numpy as jnp
from jax.experimental import pallas as pl
from jax.experimental.pallas import tpu as pltpu


def _anchor_stats_kernel(a_ref, g_ref, pos_ref, cnt_ref, *, bound, pos_thr,
                         neg_thr, min_pos_thr):
    """Per-anchor positive/negative statistics against all gt boxes.

    a_ref  : (4, TN)  anchor xyxy, coordinate-major (anchors on the lane axis)
    g_ref  : (M, 4)   gt xyxy in feature-map coords
    pos_ref: (1, TN)  best positive-pair IoU per anchor (-1.0 if none/invalid)
    cnt_ref: (1, TN)  number of negative (anchor, gt) pairs per anchor (f32)
    """
    a = a_ref[...]                                   # (4, TN)
    g = g_ref[...]                                   # (M, 4)
    ax1 = a[0:1, :]; ay1 = a[1:2, :]; ax2 = a[2:3, :]; ay2 = a[3:4, :]   # (1,TN)
    gx1 = g[:, 0:1]; gy1 = g[:, 1:2]; gx2 = g[:, 2:3]; gy2 = g[:, 3:4]   # (M,1)

    ix1 = jnp.maximum(ax1, gx1)
    iy1 = jnp.maximum(ay1, gy1)
    ix2 = jnp.minimum(ax2, gx2)
    iy2 = jnp.minimum(ay2, gy2)
    iw = jnp.maximum(ix2 - ix1, 0.0)
    ih = jnp.maximum(iy2 - iy1, 0.0)
    inter = iw * ih                                  # (M, TN)
    area_a = (ax2 - ax1) * (ay2 - ay1)               # (1, TN)
    area_g = (gx2 - gx1) * (gy2 - gy1)               # (M, 1)
    union = jnp.maximum(area_a + area_g - inter, 1e-12)   # eps: no NaN for 0-area
    # EUP reciprocal (free slot).  approx may shift IoU ~1e-3 relative; the
    # `iou == colmax` tie test stays self-consistent (colmax from same values).
    iou = inter * pl.reciprocal(union, approx=True)  # (M, TN)

    colmax = jnp.max(iou, axis=0, keepdims=True)     # per-anchor max over gt
    pos = ((iou == colmax) & (iou > min_pos_thr)) | (iou >= pos_thr)
    neg = (iou < neg_thr) & jnp.logical_not(pos)

    pos_key = jnp.max(jnp.where(pos, iou, -1.0), axis=0, keepdims=True)  # (1,TN)
    neg_cnt = jnp.sum(neg.astype(jnp.float32), axis=0, keepdims=True)    # (1,TN)

    # dropCrossBoundaries: the reference compares EVERY coordinate against 0,
    # fm_w and fm_h, i.e. every coord must lie in [0, min(fm_w, fm_h)].
    valid = ((ax1 >= 0.0) & (ay1 >= 0.0) & (ax2 >= 0.0) & (ay2 >= 0.0) &
             (ax1 <= bound) & (ay1 <= bound) & (ax2 <= bound) & (ay2 <= bound))

    pos_ref[...] = jnp.where(valid, pos_key, -1.0)
    cnt_ref[...] = jnp.where(valid, neg_cnt, 0.0)


def _round_up(x, m):
    return ((x + m - 1) // m) * m


def _pick_anchor_tiling(n, b, max_tile=8192):
    """Return (tile, padded_n): largest 128-multiple tile (<= max_tile)."""
    np_min = _round_up(n, 128)
    n_tiles = max(1, (np_min + max_tile - 1) // max_tile)
    # Keep >= 2 total grid steps so both v7x TensorCores get work; on single-TC
    # v5e/v6e the extra step is ~0.35 us, negligible.
    if b * n_tiles < 2 and np_min > 128:
        n_tiles = 2
    tn = _round_up((np_min + n_tiles - 1) // n_tiles, 128)
    return tn, tn * n_tiles


class ProposalGenerator:
    def __init__(self, fmSize, tmSize, pos_anc_iou_thresh, neg_anc_iou_thresh,
                 ratio_pos_neg):
        self.fmSize = fmSize
        self.tmSize = tmSize
        self.pos_thr = float(pos_anc_iou_thresh)
        self.neg_thr = float(neg_anc_iou_thresh)
        self.min_pos_thr = 0.5 * self.neg_thr
        self.ratio_pos_neg = ratio_pos_neg

    def _generalize_tm2fm(self, bboxes):
        # divide-by-tm then multiply-by-fm folded into one scale.
        tm_w, tm_h = self.tmSize
        fm_w, fm_h = self.fmSize
        sx = float(fm_w) / float(tm_w)
        sy = float(fm_h) / float(tm_h)
        scale = jnp.array([sx, sy, sx, sy], jnp.float32)
        return bboxes.astype(jnp.float32) * scale

    @functools.partial(jax.jit, static_argnums=0)
    def __call__(self, anchors, gt_bboxes, gt_orig_classes):
        anchors = anchors.astype(jnp.float32)
        B, N, _ = anchors.shape
        M = gt_bboxes.shape[1]
        num_neg = int(self.ratio_pos_neg * N)
        num_pos = N - num_neg
        K = num_pos + num_neg          # fixed output proposal count per batch

        gt_fm = self._generalize_tm2fm(gt_bboxes)               # (B, M, 4)

        TN, Np = _pick_anchor_tiling(N, B)
        if Np > N:
            # pad anchors are invalid (x1 = -1 < 0) -> pos_key=-1, neg_cnt=0.
            pad = jnp.full((B, Np - N, 4), -1.0, jnp.float32)
            anchors_p = jnp.concatenate([anchors, pad], axis=1)
        else:
            anchors_p = anchors
        anchors_t = jnp.transpose(anchors_p, (0, 2, 1))         # (B, 4, Np)

        kernel = functools.partial(
            _anchor_stats_kernel,
            bound=float(min(self.fmSize[0], self.fmSize[1])),
            pos_thr=self.pos_thr, neg_thr=self.neg_thr,
            min_pos_thr=self.min_pos_thr)

        pos_key, neg_cnt_f = pl.pallas_call(
            kernel,
            grid=(B, Np // TN),
            in_specs=[pl.BlockSpec((None, 4, TN), lambda b, i: (b, 0, i)),
                      pl.BlockSpec((None, M, 4), lambda b, i: (b, 0, 0))],
            out_specs=[pl.BlockSpec((None, 1, TN), lambda b, i: (b, 0, i)),
                       pl.BlockSpec((None, 1, TN), lambda b, i: (b, 0, i))],
            out_shape=(jax.ShapeDtypeStruct((B, 1, Np), jnp.float32),
                       jax.ShapeDtypeStruct((B, 1, Np), jnp.float32)),
            compiler_params=pltpu.CompilerParams(
                dimension_semantics=("parallel", "parallel")),
        )(anchors_t, gt_fm)

        pos_key = pos_key[:, 0, :]                              # (B, Np)
        neg_cnt = neg_cnt_f[:, 0, :].astype(jnp.int32)          # (B, Np)

        # ---- positives: top-k over the per-anchor best positive IoU ----
        # TODO(synk): the reference keeps one entry per positive (anchor, gt)
        # PAIR (an anchor positive for several gts appears several times); here
        # positives are de-duplicated per anchor — every duplicated entry would
        # carry the same anchor box / gt-0 class / gt-0 offsets anyway.
        n_pos = jnp.sum(pos_key > 0.0, axis=1)
        n_pos_c = jnp.minimum(n_pos, num_pos).astype(jnp.int32)     # (B,)
        k_top = max(num_pos, 1)
        _, pos_anchor_idx = jax.lax.top_k(pos_key, k_top)           # (B, k_top)
        pos_anchor_idx = pos_anchor_idx.astype(jnp.int32)

        # ---- negatives: first num_neg(+remaining) negative pairs in
        # anchor-major order, rebuilt from per-anchor counts only.  Each anchor
        # contributes a contiguous run of `cnt` identical ids: scatter the id
        # at each run start (exclusive prefix) and forward-fill with cummax.
        S = K                                                        # worst case
        prefix = jnp.cumsum(neg_cnt, axis=1) - neg_cnt               # exclusive
        start = jnp.where((neg_cnt > 0) & (prefix < S), prefix, S)   # S = dropped
        anchor_ids = jnp.broadcast_to(
            jnp.arange(Np, dtype=jnp.int32)[None, :], (B, Np))
        bidx = jnp.broadcast_to(
            jnp.arange(B, dtype=jnp.int32)[:, None], (B, Np))
        run_starts = jnp.zeros((B, S), jnp.int32).at[bidx, start].set(
            anchor_ids, mode='drop')                                 # (B, S)
        neg_anchor_slots = jax.lax.cummax(run_starts, axis=1)        # (B, S)

        # TODO(synk): assumes >= (num_neg + remaining) negative (anchor, gt)
        # pairs exist per batch; the reference would return a shorter
        # (dynamic-shape) tensor otherwise, which has no static equivalent.
        slot = jnp.arange(K, dtype=jnp.int32)[None, :]               # (1, K)
        is_pos_slot = slot < n_pos_c[:, None]                        # (B, K)
        pos_slot = jnp.broadcast_to(jnp.minimum(slot, k_top - 1), (B, K))
        neg_slot = jnp.clip(slot - n_pos_c[:, None], 0, S - 1)       # (B, K)
        anc_row = jnp.where(
            is_pos_slot,
            jnp.take_along_axis(pos_anchor_idx, pos_slot, axis=1),
            jnp.take_along_axis(neg_anchor_slots, neg_slot, axis=1))
        anc_row = jnp.minimum(anc_row, N - 1)   # pads never selected; guard only

        all_anchors = jax.vmap(lambda a, r: a[r])(anchors, anc_row)      # (B,K,4)
        gt_confscores = is_pos_slot.astype(jnp.float32)[..., None]       # (B,K,1)

        # NOTE: the reference getMappedBBoxes uses torch.where(iou_pos)[0] on a
        # (1, M) tensor, i.e. ROW indices (all zeros), so every selected anchor
        # maps to gt box 0 / gt class 0 of its batch.  Reproduced faithfully.
        gt_classes = jnp.broadcast_to(
            gt_orig_classes[:, 0:1].astype(jnp.int32)[:, :, None], (B, K, 1))

        # ---- offsets (getOffsets): fused jnp elementwise on (B, K, 4) ----
        g0 = gt_fm[:, 0, :]                                          # (B, 4)
        ax1 = all_anchors[..., 0]; ay1 = all_anchors[..., 1]
        ax2 = all_anchors[..., 2]; ay2 = all_anchors[..., 3]
        acx = (ax1 + ax2) * 0.5; acy = (ay1 + ay2) * 0.5
        aw = ax2 - ax1; ah = ay2 - ay1
        gx1 = g0[:, 0:1]; gy1 = g0[:, 1:2]; gx2 = g0[:, 2:3]; gy2 = g0[:, 3:4]
        gcx = (gx1 + gx2) * 0.5; gcy = (gy1 + gy2) * 0.5
        gw = gx2 - gx1; gh = gy2 - gy1
        tx = (gcx - acx) / aw
        ty = (gcy - acy) / ah
        tw = jnp.log(gw / aw)
        th = jnp.log(gh / ah)
        gt_offsets = jnp.stack([tx, ty, tw, th], axis=-1)            # (B, K, 4)

        return all_anchors, gt_confscores, gt_classes, gt_offsets


if __name__ == "__main__":
    key = jax.random.PRNGKey(0)
    B, N, M = 2, 256, 8
    fmSize = (16, 16)      # feature map size (w, h)
    tmSize = (256, 256)    # image ("tm") size (w, h)

    k1, k2, k3, k4, k5 = jax.random.split(key, 5)
    # anchors in feature-map coords (xyxy), widths/heights strictly positive
    a_xy = jax.random.uniform(k1, (B, N, 2), minval=0.0, maxval=12.0)
    a_wh = jax.random.uniform(k2, (B, N, 2), minval=2.0, maxval=4.0)
    anchors = jnp.concatenate([a_xy, a_xy + a_wh], axis=-1)
    # push a couple of anchors out of bounds to exercise dropCrossBoundaries
    shift = jnp.zeros((B, N, 4), jnp.float32).at[:, :2, :].add(-6.0)
    anchors = anchors + shift

    # gt boxes in image ("tm") coords (xyxy)
    g_xy = jax.random.uniform(k3, (B, M, 2), minval=0.0, maxval=180.0)
    g_wh = jax.random.uniform(k4, (B, M, 2), minval=30.0, maxval=70.0)
    gt_bboxes = jnp.concatenate([g_xy, g_xy + g_wh], axis=-1)
    gt_orig_classes = jax.random.randint(k5, (B, M), 0, 5)

    gen = ProposalGenerator(fmSize, tmSize,
                            pos_anc_iou_thresh=0.7,
                            neg_anc_iou_thresh=0.3,
                            ratio_pos_neg=0.7)

    all_anchors, gt_conf, gt_cls, gt_off = gen(anchors, gt_bboxes,
                                               gt_orig_classes)
    jax.block_until_ready((all_anchors, gt_conf, gt_cls, gt_off))

    K = N  # num_pos + num_neg
    assert all_anchors.shape == (B, K, 4)
    assert gt_conf.shape == (B, K, 1)
    assert gt_cls.shape == (B, K, 1)
    assert gt_off.shape == (B, K, 4)
    assert bool(jnp.all(jnp.isfinite(gt_off)))
    assert bool(jnp.all((gt_conf == 0.0) | (gt_conf == 1.0)))

    print("KERNEL_OK")
</pallas_src>

<mosaic_0001>
module attributes {stable_mosaic.version = 11 : i64} {
  func.func @_anchor_stats_kernel(%arg0: i32, %arg1: i32, %arg2: memref<1x4x256xf32, #tpu.memory_space<vmem>>, %arg3: memref<1x8x4xf32, #tpu.memory_space<vmem>>, %arg4: memref<1x1x256xf32, #tpu.memory_space<vmem>>, %arg5: memref<1x1x256xf32, #tpu.memory_space<vmem>>) attributes {dimension_semantics = [#tpu.dimension_semantics<parallel>, #tpu.dimension_semantics<parallel>], iteration_bounds = array<i64: 2, 1>, scalar_prefetch = 0 : i64, scratch_operands = 0 : i64, tpu.core_type = #tpu.core_type<tc>, window_params = [{transform_indices = @transform_0, window_bounds = array<i64: 1, 4, 256>}, {transform_indices = @transform_1, window_bounds = array<i64: 1, 8, 4>}, {transform_indices = @transform_2, window_bounds = array<i64: 1, 1, 256>}, {transform_indices = @transform_3, window_bounds = array<i64: 1, 1, 256>}]} {
    %c0 = arith.constant 0 : index
    %c0_0 = arith.constant 0 : index
    %c0_1 = arith.constant 0 : index
    %0 = vector.load %arg2[%c0, %c0_0, %c0_1] : memref<1x4x256xf32, #tpu.memory_space<vmem>>, vector<1x4x256xf32>
    %1 = vector.shape_cast %0 : vector<1x4x256xf32> to vector<4x256xf32>
    %c0_2 = arith.constant 0 : index
    %c0_3 = arith.constant 0 : index
    %c0_4 = arith.constant 0 : index
    %2 = vector.load %arg3[%c0_2, %c0_3, %c0_4] : memref<1x8x4xf32, #tpu.memory_space<vmem>>, vector<1x8x4xf32>
    %3 = vector.shape_cast %2 : vector<1x8x4xf32> to vector<8x4xf32>
    %4 = vector.extract_strided_slice %1 {offsets = [0, 0], sizes = [1, 256], strides = [1, 1]} : vector<4x256xf32> to vector<1x256xf32>
    %5 = vector.extract_strided_slice %1 {offsets = [1, 0], sizes = [1, 256], strides = [1, 1]} : vector<4x256xf32> to vector<1x256xf32>
    %6 = vector.extract_strided_slice %1 {offsets = [2, 0], sizes = [1, 256], strides = [1, 1]} : vector<4x256xf32> to vector<1x256xf32>
    %7 = vector.extract_strided_slice %1 {offsets = [3, 0], sizes = [1, 256], strides = [1, 1]} : vector<4x256xf32> to vector<1x256xf32>
    %8 = vector.extract_strided_slice %3 {offsets = [0, 0], sizes = [8, 1], strides = [1, 1]} : vector<8x4xf32> to vector<8x1xf32>
    %9 = vector.extract_strided_slice %3 {offsets = [0, 1], sizes = [8, 1], strides = [1, 1]} : vector<8x4xf32> to vector<8x1xf32>
    %10 = vector.extract_strided_slice %3 {offsets = [0, 2], sizes = [8, 1], strides = [1, 1]} : vector<8x4xf32> to vector<8x1xf32>
    %11 = vector.extract_strided_slice %3 {offsets = [0, 3], sizes = [8, 1], strides = [1, 1]} : vector<8x4xf32> to vector<8x1xf32>
    %12 = vector.broadcast %4 : vector<1x256xf32> to vector<8x256xf32>
    %13 = vector.broadcast %8 : vector<8x1xf32> to vector<8x256xf32>
    %14 = arith.maximumf %12, %13 : vector<8x256xf32>
    %15 = vector.broadcast %5 : vector<1x256xf32> to vector<8x256xf32>
    %16 = vector.broadcast %9 : vector<8x1xf32> to vector<8x256xf32>
    %17 = arith.maximumf %15, %16 : vector<8x256xf32>
    %18 = vector.broadcast %6 : vector<1x256xf32> to vector<8x256xf32>
    %19 = vector.broadcast %10 : vector<8x1xf32> to vector<8x256xf32>
    %20 = arith.minimumf %18, %19 : vector<8x256xf32>
    %21 = vector.broadcast %7 : vector<1x256xf32> to vector<8x256xf32>
    %22 = vector.broadcast %11 : vector<8x1xf32> to vector<8x256xf32>
    %23 = arith.minimumf %21, %22 : vector<8x256xf32>
    %24 = arith.subf %20, %14 : vector<8x256xf32>
    %cst = arith.constant 0.000000e+00 : f32
    %25 = vector.broadcast %cst : f32 to vector<8x256xf32>
    %26 = arith.maximumf %24, %25 : vector<8x256xf32>
    %27 = arith.subf %23, %17 : vector<8x256xf32>
    %cst_5 = arith.constant 0.000000e+00 : f32
    %28 = vector.broadcast %cst_5 : f32 to vector<8x256xf32>
    %29 = arith.maximumf %27, %28 : vector<8x256xf32>
    %30 = arith.mulf %26, %29 : vector<8x256xf32>
    %31 = arith.subf %6, %4 : vector<1x256xf32>
    %32 = arith.subf %7, %5 : vector<1x256xf32>
    %33 = arith.mulf %31, %32 : vector<1x256xf32>
    %34 = arith.subf %10, %8 : vector<8x1xf32>
    %35 = arith.subf %11, %9 : vector<8x1xf32>
    %36 = arith.mulf %34, %35 : vector<8x1xf32>
    %37 = vector.broadcast %33 : vector<1x256xf32> to vector<8x256xf32>
    %38 = vector.broadcast %36 : vector<8x1xf32> to vector<8x256xf32>
    %39 = arith.addf %37, %38 : vector<8x256xf32>
    %40 = arith.subf %39, %30 : vector<8x256xf32>
    %cst_6 = arith.constant 9.99999996E-13 : f32
    %41 = vector.broadcast %cst_6 : f32 to vector<8x256xf32>
    %42 = arith.maximumf %40, %41 : vector<8x256xf32>
    %43 = tpu.reciprocal %42 {approx = true} : vector<8x256xf32> -> vector<8x256xf32>
    %44 = arith.mulf %30, %43 : vector<8x256xf32>
    %cst_7 = arith.constant dense<0xFF800000> : vector<256xf32>
    %45 = vector.multi_reduction <maximumf>, %44, %cst_7 [0] : vector<8x256xf32> to vector<256xf32>
    %46 = vector.shape_cast %45 : vector<256xf32> to vector<1x256xf32>
    %47 = vector.broadcast %46 : vector<1x256xf32> to vector<8x256xf32>
    %48 = arith.cmpf oeq, %44, %47 : vector<8x256xf32>
    %cst_8 = arith.constant 1.500000e-01 : f32
    %49 = vector.broadcast %cst_8 : f32 to vector<8x256xf32>
    %50 = arith.cmpf ogt, %44, %49 : vector<8x256xf32>
    %51 = arith.andi %48, %50 : vector<8x256xi1>
    %cst_9 = arith.constant 0.699999988 : f32
    %52 = vector.broadcast %cst_9 : f32 to vector<8x256xf32>
    %53 = arith.cmpf oge, %44, %52 : vector<8x256xf32>
    %54 = arith.ori %51, %53 : vector<8x256xi1>
    %cst_10 = arith.constant 3.000000e-01 : f32
    %55 = vector.broadcast %cst_10 : f32 to vector<8x256xf32>
    %56 = arith.cmpf olt, %44, %55 : vector<8x256xf32>
    %cst_11 = arith.constant dense<true> : vector<8x256xi1>
    %57 = arith.xori %54, %cst_11 : vector<8x256xi1>
    %58 = arith.andi %56, %57 : vector<8x256xi1>
    %cst_12 = arith.constant -1.000000e+00 : f32
    %59 = vector.broadcast %cst_12 : f32 to vector<8x256xf32>
    %60 = arith.select %54, %44, %59 : vector<8x256xi1>, vector<8x256xf32>
    %cst_13 = arith.constant dense<0xFF800000> : vector<256xf32>
    %61 = vector.multi_reduction <maximumf>, %60, %cst_13 [0] : vector<8x256xf32> to vector<256xf32>
    %62 = vector.shape_cast %61 : vector<256xf32> to vector<1x256xf32>
    %63 = arith.extui %58 : vector<8x256xi1> to vector<8x256xi32>
    %64 = arith.sitofp %63 : vector<8x256xi32> to vector<8x256xf32>
    %cst_14 = arith.constant dense<0.000000e+00> : vector<256xf32>
    %65 = vector.multi_reduction <add>, %64, %cst_14 [0] : vector<8x256xf32> to vector<256xf32>
    %66 = vector.shape_cast %65 : vector<256xf32> to vector<1x256xf32>
    %cst_15 = arith.constant 0.000000e+00 : f32
    %67 = vector.broadcast %cst_15 : f32 to vector<1x256xf32>
    %68 = arith.cmpf oge, %4, %67 : vector<1x256xf32>
    %cst_16 = arith.constant 0.000000e+00 : f32
    %69 = vector.broadcast %cst_16 : f32 to vector<1x256xf32>
    %70 = arith.cmpf oge, %5, %69 : vector<1x256xf32>
    %71 = arith.andi %68, %70 : vector<1x256xi1>
    %cst_17 = arith.constant 0.000000e+00 : f32
    %72 = vector.broadcast %cst_17 : f32 to vector<1x256xf32>
    %73 = arith.cmpf oge, %6, %72 : vector<1x256xf32>
    %74 = arith.andi %71, %73 : vector<1x256xi1>
    %cst_18 = arith.constant 0.000000e+00 : f32
    %75 = vector.broadcast %cst_18 : f32 to vector<1x256xf32>
    %76 = arith.cmpf oge, %7, %75 : vector<1x256xf32>
    %77 = arith.andi %74, %76 : vector<1x256xi1>
    %cst_19 = arith.constant 1.600000e+01 : f32
    %78 = vector.broadcast %cst_19 : f32 to vector<1x256xf32>
    %79 = arith.cmpf ole, %4, %78 : vector<1x256xf32>
    %80 = arith.andi %77, %79 : vector<1x256xi1>
    %cst_20 = arith.constant 1.600000e+01 : f32
    %81 = vector.broadcast %cst_20 : f32 to vector<1x256xf32>
    %82 = arith.cmpf ole, %5, %81 : vector<1x256xf32>
    %83 = arith.andi %80, %82 : vector<1x256xi1>
    %cst_21 = arith.constant 1.600000e+01 : f32
    %84 = vector.broadcast %cst_21 : f32 to vector<1x256xf32>
    %85 = arith.cmpf ole, %6, %84 : vector<1x256xf32>
    %86 = arith.andi %83, %85 : vector<1x256xi1>
    %cst_22 = arith.constant 1.600000e+01 : f32
    %87 = vector.broadcast %cst_22 : f32 to vector<1x256xf32>
    %88 = arith.cmpf ole, %7, %87 : vector<1x256xf32>
    %89 = arith.andi %86, %88 : vector<1x256xi1>
    %cst_23 = arith.constant -1.000000e+00 : f32
    %90 = vector.broadcast %cst_23 : f32 to vector<1x256xf32>
    %91 = arith.select %89, %62, %90 : vector<1x256xi1>, vector<1x256xf32>
    %c0_24 = arith.constant 0 : index
    %c0_25 = arith.constant 0 : index
    %c0_26 = arith.constant 0 : index
    %92 = vector.load %arg4[%c0_24, %c0_25, %c0_26] : memref<1x1x256xf32, #tpu.memory_space<vmem>>, vector<1x1x256xf32>
    %93 = vector.shape_cast %92 : vector<1x1x256xf32> to vector<1x256xf32>
    %94 = vector.shape_cast %91 : vector<1x256xf32> to vector<1x1x256xf32>
    tpu.vector_store %arg4[%c0_24, %c0_25, %c0_26], %94 {strides = array<i32>} : memref<1x1x256xf32, #tpu.memory_space<vmem>>, vector<1x1x256xf32>,
    %cst_27 = arith.constant 0.000000e+00 : f32
    %95 = vector.broadcast %cst_27 : f32 to vector<1x256xf32>
    %96 = arith.select %89, %66, %95 : vector<1x256xi1>, vector<1x256xf32>
    %c0_28 = arith.constant 0 : index
    %c0_29 = arith.constant 0 : index
    %c0_30 = arith.constant 0 : index
    %97 = vector.load %arg5[%c0_28, %c0_29, %c0_30] : memref<1x1x256xf32, #tpu.memory_space<vmem>>, vector<1x1x256xf32>
    %98 = vector.shape_cast %97 : vector<1x1x256xf32> to vector<1x256xf32>
    %99 = vector.shape_cast %96 : vector<1x256xf32> to vector<1x1x256xf32>
    tpu.vector_store %arg5[%c0_28, %c0_29, %c0_30], %99 {strides = array<i32>} : memref<1x1x256xf32, #tpu.memory_space<vmem>>, vector<1x1x256xf32>,
    return
  }
  func.func @transform_0(%arg0: i32, %arg1: i32) -> (i32, i32, i32) {
    %c0_i32 = arith.constant 0 : i32
    %c0_i32_0 = arith.constant 0 : i32
    return %arg0, %c0_i32, %arg1 : i32, i32, i32
  }
  func.func @transform_1(%arg0: i32, %arg1: i32) -> (i32, i32, i32) {
    %c0_i32 = arith.constant 0 : i32
    %c0_i32_0 = arith.constant 0 : i32
    %c0_i32_1 = arith.constant 0 : i32
    return %arg0, %c0_i32, %c0_i32_0 : i32, i32, i32
  }
  func.func @transform_2(%arg0: i32, %arg1: i32) -> (i32, i32, i32) {
    %c0_i32 = arith.constant 0 : i32
    %c0_i32_0 = arith.constant 0 : i32
    return %arg0, %c0_i32, %arg1 : i32, i32, i32
  }
  func.func @transform_3(%arg0: i32, %arg1: i32) -> (i32, i32, i32) {
    %c0_i32 = arith.constant 0 : i32
    %c0_i32_0 = arith.constant 0 : i32
    return %arg0, %c0_i32, %arg1 : i32, i32, i32
  }
}

</mosaic_0001>

<llo_original>
// kernel: a_call__.1
$region0: #{a_call__.1}
  #allocation0 [shape = 'u32[]', space=smem, size = 0x4, offset = 0x4, fixed_abs, tag = 'smem constant byte address 0x4 - core index']
  #allocation1 [shape = 'u32[72,128]{1,0:T(1,128)}', space=vmem, size = 0x9000, scoped, tag = 'internal scratch']
  %s0 = inlined_call_operand.vmem [shape: f32[2,4,256], index: 0, kind: input, shape index: {}]
  %s1 = inlined_call_operand.vmem [shape: f32[2,8,4], index: 1, kind: input, shape index: {}]
  %s2 = inlined_call_operand.vmem [shape: f32[2,1,256], index: 2, kind: output, shape index: {0}]
  %s3 = inlined_call_operand.vmem [shape: f32[2,1,256], index: 3, kind: output, shape index: {1}]
  %4 = xla_tuple %s2, %s3
  %s5 = sld [smem:[#allocation0]]
  $region49: #{a_call__.1} parent=0
    _
  %s7 = ssub.s32 1, %s5
  %s8 = scalar_select 0, %s7, %s5
  loop: start=0, step=1, limit=4
  $region2: #{a_call__.1} parent=0 // loop_pre_header
    _
  $region3: #{a_call__.1} parent=0 // loop_header
    %s10 = sphi 0, %s14
    %p11 = scmp.ge.s32.totalorder %s10, 4
    %s17 = sphi 0, %s29
    %s18 = sphi 0, %s25
    %s19 = sphi 0, %s17
    %s20 = sphi 0, %s18
    %s21 = sphi 0, %s19
    %s22 = sphi 0, %s20
    %s34 = sphi 0, %s36
    %s37 = sphi 0, %s34
    %s38 = sphi 0, %s37
    %s54 = sphi 0, %s38
    %s60 = sphi 0, %s62
    %s63 = sphi 0, %s60
    %s64 = sphi 0, %s63
    %s80 = sphi 0, %s64
    %s88 = sphi 0, %s90
    %s91 = sphi 0, %s88
    %s92 = sphi 0, %s91
    %s108 = sphi 0, %s92
    %s116 = sphi 0, %s118
    %s119 = sphi 0, %s116
    %s120 = sphi 0, %s119
    %s136 = sphi 0, %s120
  $region4: #{a_call__.1} parent=0 // loop_header_branch
    %13 = sbr.rel (%p11) target = $region8
  $region5: #{a_call__.1} parent=0 // loop_body
    %s15 = ssub.s32 %s10, 1
    %s16 = ssub.s32 %s10, 2
    %s23 = sadd.s32 1, %s18
    %p24 = scmp.ge.s32.totalorder %s23, 1
    %s25 = scalar_select %p24, 0, %s23
    %s26 = sadd.s32 1, %s17
    %s27 = scalar_select %p24, %s26, %s17
    %p28 = scmp.ge.s32.totalorder %s27, 2
    %s29 = scalar_select %p28, 0, %s27
    %s30 = ssub.s32 %s17, %s29
    %s31 = ssub.s32 %s18, %s25
    %s32 = sor.u32 %s30, %s31
    %p33 = scmp.eq.s32.totalorder %s32, 0
    %s35 = sadd.s32 %s34, 1
    %s36 = scalar_select %p33, %s34, %s35
    %p39 = pneg %p33
    %p40 = scmp.eq.s32.totalorder %s10, 1
    %p41 = por %p39, %p40
    %p42 = scmp.ne.s32.totalorder %s34, %s37
    %p43 = scmp.eq.s32.totalorder %s10, 0
    %p44 = por %p42, %p43
    %p45 = scmp.ne.s32.totalorder %s34, %s37
    %p46 = scmp.eq.s32.totalorder %s15, 1
    %p47 = por %p45, %p46
    %p48 = scmp.ne.s32.totalorder %s37, %s38
    %p49 = scmp.eq.s32.totalorder %s15, 0
    %p50 = por %p48, %p49
    %p51 = scmp.ne.s32.totalorder %s37, %s38
    %p52 = scmp.eq.s32.totalorder %s16, 1
    %p53 = por %p51, %p52
    %p55 = scmp.ne.s32.totalorder %s38, %s54
    %p56 = scmp.eq.s32.totalorder %s16, 0
    %p57 = por %p55, %p56
    %s58 = ssub.s32 %s17, %s29
    %p59 = scmp.eq.s32.totalorder %s58, 0
    %s61 = sadd.s32 %s60, 1
    %s62 = scalar_select %p59, %s60, %s61
    %p65 = pneg %p59
    %p66 = scmp.eq.s32.totalorder %s10, 1
    %p67 = por %p65, %p66
    %p68 = scmp.ne.s32.totalorder %s60, %s63
    %p69 = scmp.eq.s32.totalorder %s10, 0
    %p70 = por %p68, %p69
    %p71 = scmp.ne.s32.totalorder %s60, %s63
    %p72 = scmp.eq.s32.totalorder %s15, 1
    %p73 = por %p71, %p72
    %p74 = scmp.ne.s32.totalorder %s63, %s64
    %p75 = scmp.eq.s32.totalorder %s15, 0
    %p76 = por %p74, %p75
    %p77 = scmp.ne.s32.totalorder %s63, %s64
    %p78 = scmp.eq.s32.totalorder %s16, 1
    %p79 = por %p77, %p78
    %p81 = scmp.ne.s32.totalorder %s64, %s80
    %p82 = scmp.eq.s32.totalorder %s16, 0
    %p83 = por %p81, %p82
    %s84 = ssub.s32 %s17, %s29
    %s85 = ssub.s32 %s18, %s25
    %s86 = sor.u32 %s84, %s85
    %p87 = scmp.eq.s32.totalorder %s86, 0
    %s89 = sadd.s32 %s88, 1
    %s90 = scalar_select %p87, %s88, %s89
    %p93 = pneg %p87
    %p94 = scmp.eq.s32.totalorder %s10, 1
    %p95 = por %p93, %p94
    %p96 = scmp.ne.s32.totalorder %s88, %s91
    %p97 = scmp.eq.s32.totalorder %s10, 0
    %p98 = por %p96, %p97
    %p99 = scmp.ne.s32.totalorder %s88, %s91
    %p100 = scmp.eq.s32.totalorder %s15, 1
    %p101 = por %p99, %p100
    %p102 = scmp.ne.s32.totalorder %s91, %s92
    %p103 = scmp.eq.s32.totalorder %s15, 0
    %p104 = por %p102, %p103
    %p105 = scmp.ne.s32.totalorder %s91, %s92
    %p106 = scmp.eq.s32.totalorder %s16, 1
    %p107 = por %p105, %p106
    %p109 = scmp.ne.s32.totalorder %s92, %s108
    %p110 = scmp.eq.s32.totalorder %s16, 0
    %p111 = por %p109, %p110
    %s112 = ssub.s32 %s17, %s29
    %s113 = ssub.s32 %s18, %s25
    %s114 = sor.u32 %s112, %s113
    %p115 = scmp.eq.s32.totalorder %s114, 0
    %s117 = sadd.s32 %s116, 1
    %s118 = scalar_select %p115, %s116, %s117
    %p121 = pneg %p115
    %p122 = scmp.eq.s32.totalorder %s10, 1
    %p123 = por %p121, %p122
    %p124 = scmp.ne.s32.totalorder %s116, %s119
    %p125 = scmp.eq.s32.totalorder %s10, 0
    %p126 = por %p124, %p125
    %p127 = scmp.ne.s32.totalorder %s116, %s119
    %p128 = scmp.eq.s32.totalorder %s15, 1
    %p129 = por %p127, %p128
    %p130 = scmp.ne.s32.totalorder %s119, %s120
    %p131 = scmp.eq.s32.totalorder %s15, 0
    %p132 = por %p130, %p131
    %p133 = scmp.ne.s32.totalorder %s119, %s120
    %p134 = scmp.eq.s32.totalorder %s16, 1
    %p135 = por %p133, %p134
    %p137 = scmp.ne.s32.totalorder %s120, %s136
    %p138 = scmp.eq.s32.totalorder %s16, 0
    %p139 = por %p137, %p138
    %p140 = scmp.le.s32.totalorder 1, %s10
    %p141 = scmp.lt.s32.totalorder %s10, 3
    %p142 = pnand %p140, %p141
    %p143 = pneg %p142
    // Predicated region
    $region9: #{a_call__.1} parent=5 // pred_check
      _
    $region10: #{a_call__.1} parent=5 // pred_check_branch
      %145 = sbr.rel (%p142) target = $region12
    $region11: #{a_call__.1} parent=5 // pred_region
      %s146 = ssub.s32 %s10, 1
    $region12: #{a_call__.1} parent=5 // pred_fallthru
      _
    %p147 = scmp.lt.s32.totalorder %s10, 2
    // Predicated region
    $region13: #{a_call__.1} parent=5 // pred_check
      %p148 = pneg %p147
    $region14: #{a_call__.1} parent=5 // pred_check_branch
      %150 = sbr.rel (%p148) target = $region16
    $region15: #{a_call__.1} parent=5 // pred_region
      // Predicated region
      $region17: #{a_call__.1} parent=15 // pred_check
        %p151 = pneg %p44
      $region18: #{a_call__.1} parent=15 // pred_check_branch
        %153 = sbr.rel (%p151) target = $region20
      $region19: #{a_call__.1} parent=15 // pred_region
        %s154 = smul.u32 2, %s18
        %p155 = scmp.lt.s32.totalorder %s17, 1
        %s156 = scalar_select %p155, %s17, 1
        %p157 = scmp.lt.s32.totalorder %s154, 1
        %s158 = scalar_select %p157, %s154, 1
        %s159 = smul.addr %s156, 2
        %s160 = sadd.s32 %s158, %s159
        %s161 = smul.addr %s160, 4
        %s162 = scalar_lea.vmem %s0, %s161
        %s163 = smul.u32 2, %s18
      $region20: #{a_call__.1} parent=15 // pred_fallthru
        _
      // Predicated region
      $region21: #{a_call__.1} parent=15 // pred_check
        %p164 = pneg %p70
      $region22: #{a_call__.1} parent=15 // pred_check_branch
        %166 = sbr.rel (%p164) target = $region24
      $region23: #{a_call__.1} parent=15 // pred_region
        %p167 = scmp.lt.s32.totalorder %s17, 1
        %s168 = scalar_select %p167, %s17, 1
        %s169 = smul.addr %s168, 8
        %s170 = scalar_lea.vmem %s1, %s169
      $region24: #{a_call__.1} parent=15 // pred_fallthru
        _
    $region16: #{a_call__.1} parent=5 // pred_fallthru
      _
    %p171 = scmp.le.s32.totalorder 1, %s10
    %p172 = scmp.lt.s32.totalorder %s10, 3
    %p173 = pnand %p171, %p172
    %p174 = pneg %p173
    // Predicated region
    $region25: #{a_call__.1} parent=5 // pred_check
      _
    $region26: #{a_call__.1} parent=5 // pred_check_branch
      %176 = sbr.rel (%p173) target = $region28
    $region27: #{a_call__.1} parent=5 // pred_region
      %s177 = ssub.s32 %s10, 1
      %s178 = smul.u32 2, %s20
      %p179 = scmp.lt.s32.totalorder %s19, 1
      %s180 = scalar_select %p179, %s19, 1
      %p181 = scmp.lt.s32.totalorder %s178, 1
      %s182 = scalar_select %p181, %s178, 1
      %s183 = smul.addr %s180, 2
      %s184 = sadd.s32 %s182, %s183
      %s185 = smul.addr %s184, 4
      %s186 = scalar_lea.vmem %s0, %s185
      %p187 = pneg %p50
      %p188 = pneg %p47
      %p189 = scmp.lt.s32.totalorder %s19, 1
      %s190 = scalar_select %p189, %s19, 1
      %s191 = smul.addr %s190, 8
      %s192 = scalar_lea.vmem %s1, %s191
      %p193 = pneg %p76
      %p194 = pneg %p73
      %p195 = pneg %p104
      %p196 = pneg %p101
      %s197 = smul.u32 2, %s20
      %p198 = scmp.lt.s32.totalorder %s19, 1
      %s199 = scalar_select %p198, %s19, 1
      %p200 = scmp.lt.s32.totalorder %s197, 1
      %s201 = scalar_select %p200, %s197, 1
      %s202 = smul.addr %s199, 2
      %s203 = sadd.s32 %s201, %s202
      %s204 = scalar_lea.vmem %s2, %s203
      %p205 = pneg %p132
      %p206 = pneg %p129
      %s207 = smul.u32 2, %s20
      %p208 = scmp.lt.s32.totalorder %s19, 1
      %s209 = scalar_select %p208, %s19, 1
      %p210 = scmp.lt.s32.totalorder %s207, 1
      %s211 = scalar_select %p210, %s207, 1
      %s212 = smul.addr %s209, 2
      %s213 = sadd.s32 %s211, %s212
      %s214 = scalar_lea.vmem %s3, %s213
      %s215 = smul.u32 2, %s20
      %p216 = scmp.lt.s32.totalorder %s19, 1
      %s217 = scalar_select %p216, %s19, 1
      %p218 = scmp.lt.s32.totalorder %s215, 1
      %s219 = scalar_select %p218, %s215, 1
      %s220 = smul.addr %s217, 2
      %s221 = sadd.s32 %s219, %s220
      %s222 = smul.addr %s221, 4
      %s223 = scalar_lea.vmem %s0, %s222
      %s224 = smul.u32 2, %s20
      %p225 = scmp.lt.s32.totalorder %s19, 1
      %s226 = scalar_select %p225, %s19, 1
      %s227 = smul.addr %s226, 8
      %s228 = scalar_lea.vmem %s1, %s227
      %s229 = smul.u32 2, %s20
      %p230 = scmp.lt.s32.totalorder %s19, 1
      %s231 = scalar_select %p230, %s19, 1
      %p232 = scmp.lt.s32.totalorder %s229, 1
      %s233 = scalar_select %p232, %s229, 1
      %s234 = smul.addr %s231, 2
      %s235 = sadd.s32 %s233, %s234
      %s236 = scalar_lea.vmem %s2, %s235
      %s237 = smul.u32 2, %s20
      %s238 = smul.u32 2, %s20
      %p239 = scmp.lt.s32.totalorder %s19, 1
      %s240 = scalar_select %p239, %s19, 1
      %p241 = scmp.lt.s32.totalorder %s238, 1
      %s242 = scalar_select %p241, %s238, 1
      %s243 = smul.addr %s240, 2
      %s244 = sadd.s32 %s242, %s243
      %s245 = scalar_lea.vmem %s3, %s244
      %s246 = smul.u32 2, %s20
      %v247 = vld [vmem:[%s223] sm:$0xff]
      %v248 = vld [vmem:[%s228] sm:$0xff]
      %v250 = vperm.slane %v247, 0
      %v251 = vperm.slane %v247, 4
      %v254 = vperm.slane %v250, 0
      %v255 = vperm.slane %v251, 0
      %257 = vset.pattern.permute.xlu0 0
      %258 = vperm.xlu0 %257, %v248
      %v259 = vpop.permute.xlu0 %258
      %v261 = vmax.f32 %v254, %v259
      %v262 = vmax.f32 %v255, %v259
      %v263 = vperm.slane %v247, 1
      %v264 = vperm.slane %v247, 5
      %v267 = vperm.slane %v263, 1
      %v268 = vperm.slane %v264, 1
      %269 = vset.pattern.permute.xlu0 1
      %270 = vperm.xlu0 %269, %v248
      %v271 = vpop.permute.xlu0 %270
      %v273 = vmax.f32 %v267, %v271
      %v274 = vmax.f32 %v268, %v271
      %v275 = vperm.slane %v247, 2
      %v276 = vperm.slane %v247, 6
      %v279 = vperm.slane %v275, 2
      %v280 = vperm.slane %v276, 2
      %281 = vset.pattern.permute.xlu0 2
      %282 = vperm.xlu0 %281, %v248
      %v283 = vpop.permute.xlu0 %282
      %v285 = vmin.f32 %v279, %v283
      %v286 = vmin.f32 %v280, %v283
      %v287 = vperm.slane %v247, 3
      %v288 = vperm.slane %v247, 7
      %v291 = vperm.slane %v287, 3
      %v292 = vperm.slane %v288, 3
      %293 = vset.pattern.permute.xlu0 3
      %294 = vperm.xlu0 %293, %v248
      %v295 = vpop.permute.xlu0 %294
      %v297 = vmin.f32 %v291, %v295
      %v298 = vmin.f32 %v292, %v295
      %v299 = vsub.f32 %v285, %v261
      %v300 = vsub.f32 %v286, %v262
      %v301 = vmax.f32 %v299, 0.0
      %v302 = vmax.f32 %v300, 0.0
      %v303 = vsub.f32 %v297, %v273
      %v304 = vsub.f32 %v298, %v274
      %v305 = vmax.f32 %v303, 0.0
      %v306 = vmax.f32 %v304, 0.0
      %v307 = vmul.f32 %v301, %v305
      %v308 = vmul.f32 %v302, %v306
      %v309 = vrot.slane %v247, 6
      %v311 = vsub.f32 %v247, %v309
      %v313 = vrot.slane %v311, 5
      %v314 = vrot.slane %v313, 4
      %v316 = vmul.f32 %v311, %v314
      %317 = vrot.lane.b32.xlu0 %v248, 2
      %v318 = vpop.permute.xlu0 %317
      %v320 = vsub.f32 %v248, %v318
      %322 = vrot.lane.b32.xlu0 %v320, 127
      %v323 = vpop.permute.xlu0 %322
      %v325 = vmul.f32 %v320, %v323
      %v327 = vperm.slane %v316, 2
      %v328 = vperm.slane %v316, 6
      %v331 = vperm.slane %v327, 2
      %v332 = vperm.slane %v328, 2
      %334 = vset.pattern.permute.xlu0 2
      %335 = vperm.xlu0 %334, %v325
      %v336 = vpop.permute.xlu0 %335
      %v338 = vadd.f32 %v331, %v336
      %v339 = vadd.f32 %v332, %v336
      %v340 = vsub.f32 %v338, %v307
      %v341 = vsub.f32 %v339, %v308
      %v342 = vmax.f32 %v340, 1e-12
      %v343 = vmax.f32 %v341, 1e-12
      %v344 = vrcp.pop %v342
      %v345 = vrcp.pop %v343
      %v346 = vmul.f32 %v307, %v344
      %v347 = vmul.f32 %v308, %v345
      %v348 = vrot.slane %v346, 4
      %v349 = vmax.f32 %v346, %v348
      %v350 = vrot.slane %v349, 2
      %v351 = vmax.f32 %v349, %v350
      %v352 = vrot.slane %v351, 1
      %v353 = vmax.f32 %v351, %v352
      %v354 = vrot.slane %v347, 4
      %v355 = vmax.f32 %v347, %v354
      %v356 = vrot.slane %v355, 2
      %v357 = vmax.f32 %v355, %v356
      %v358 = vrot.slane %v357, 1
      %v359 = vmax.f32 %v357, %v358
      %vm360 = vcmp.eq.f32.partialorder %v346, %v353
      %vm361 = vcmp.eq.f32.partialorder %v347, %v359
      %vm362 = vcmp.gt.f32.partialorder %v346, 0.15
      %vm363 = vcmp.gt.f32.partialorder %v347, 0.15
      %vm364 = vmand %vm360, %vm362
      %vm365 = vmand %vm361, %vm363
      %vm366 = vcmp.ge.f32.partialorder %v346, 0.7
      %vm367 = vcmp.ge.f32.partialorder %v347, 0.7
      %vm368 = vmor %vm364, %vm366
      %vm369 = vmor %vm365, %vm367
      %vm370 = vcmp.lt.f32.partialorder %v346, 0.3
      %vm371 = vcmp.lt.f32.partialorder %v347, 0.3
      %vm372 = vmxor %vm368, 1
      %vm373 = vmxor %vm369, 1
      %vm374 = vmand %vm370, %vm372
      %vm375 = vmand %vm371, %vm373
      %v376 = vsel %vm368, %v346, -1.0
      %v377 = vsel %vm369, %v347, -1.0
      %v378 = vrot.slane %v376, 4
      %v379 = vmax.f32 %v376, %v378
      %v380 = vrot.slane %v379, 2
      %v381 = vmax.f32 %v379, %v380
      %v382 = vrot.slane %v381, 1
      %v383 = vmax.f32 %v381, %v382
      %v384 = vrot.slane %v377, 4
      %v385 = vmax.f32 %v377, %v384
      %v386 = vrot.slane %v385, 2
      %v387 = vmax.f32 %v385, %v386
      %v388 = vrot.slane %v387, 1
      %v389 = vmax.f32 %v387, %v388
      %v390 = vsel %vm374, 1, 0
      %v391 = vsel %vm375, 1, 0
      %v392 = vcvt.s32.f32 %v390
      %v393 = vcvt.s32.f32 %v391
      %v394 = vrot.slane %v392, 4
      %v395 = vadd.f32 %v392, %v394
      %v396 = vrot.slane %v395, 2
      %v397 = vadd.f32 %v395, %v396
      %v398 = vrot.slane %v397, 1
      %v399 = vadd.f32 %v397, %v398
      %v400 = vrot.slane %v393, 4
      %v401 = vadd.f32 %v393, %v400
      %v402 = vrot.slane %v401, 2
      %v403 = vadd.f32 %v401, %v402
      %v404 = vrot.slane %v403, 1
      %v405 = vadd.f32 %v403, %v404
      %vm406 = vcmp.ge.f32.partialorder %v247, 0.0
      %v407 = vsel %vm406, 1, 0
      %v408 = vrot.slane %v407, 5
      %v409 = vrot.slane %v408, 4
      %vm410 = vcmp.ne.s32.totalorder %v409, 0
      %vm411 = vmand %vm406, %vm410
      %v412 = vrot.slane %v407, 6
      %v413 = vrot.slane %v412, 4
      %vm414 = vcmp.ne.s32.totalorder %v413, 0
      %vm415 = vmand %vm411, %vm414
      %v416 = vrot.slane %v407, 7
      %v417 = vrot.slane %v416, 4
      %vm418 = vcmp.ne.s32.totalorder %v417, 0
      %vm419 = vmand %vm415, %vm418
      %vm420 = vcmp.le.f32.partialorder %v247, 16.0
      %vm421 = vmand %vm419, %vm420
      %v422 = vsel %vm420, 1, 0
      %v423 = vrot.slane %v422, 5
      %v424 = vrot.slane %v423, 4
      %vm425 = vcmp.ne.s32.totalorder %v424, 0
      %vm426 = vmand %vm421, %vm425
      %v427 = vrot.slane %v422, 6
      %v428 = vrot.slane %v427, 4
      %vm429 = vcmp.ne.s32.totalorder %v428, 0
      %vm430 = vmand %vm426, %vm429
      %v431 = vrot.slane %v422, 7
      %v432 = vrot.slane %v431, 4
      %vm433 = vcmp.ne.s32.totalorder %v432, 0
      %vm434 = vmand %vm430, %vm433
      %v437 = vrot.slane %v389, 4
      %vm438 = vcmask 1043456
      %v439 = vsel %vm438, %v383, %v437
      %v441 = vsel %vm434, %v439, -1.0
      %v443 = vrot.slane %v441, 3
      %vm444 = vcmask 1040384
      %v445 = vsel %vm444, %v441, %v443
      %v447 = vlaneseq
      %vm448 = vcmp.ge.s32.totalorder %v447, 0
      %vm449 = vcmp.lt.s32.totalorder %v447, 256
      %vm450 = vmand %vm448, %vm449
      %451 = vst.msk [vmem:[%s236] sm:$0x3] %vm450, %v445
      %v454 = vrot.slane %v405, 4
      %v455 = vsel %vm438, %v399, %v454
      %v457 = vsel %vm434, %v455, 0.0
      %v459 = vrot.slane %v457, 3
      %v460 = vsel %vm444, %v457, %v459
      %462 = vst.msk [vmem:[%s245] sm:$0x3] %vm450, %v460
      %s463 = smul.u32 2, %s20
      %p464 = scmp.lt.s32.totalorder %s19, 1
      %s465 = scalar_select %p464, %s19, 1
      %p466 = scmp.lt.s32.totalorder %s463, 1
      %s467 = scalar_select %p466, %s463, 1
      %s468 = smul.addr %s465, 2
      %s469 = sadd.s32 %s467, %s468
      %s470 = scalar_lea.vmem %s2, %s469
      %s471 = smul.u32 2, %s20
      %p472 = scmp.lt.s32.totalorder %s19, 1
      %s473 = scalar_select %p472, %s19, 1
      %p474 = scmp.lt.s32.totalorder %s471, 1
      %s475 = scalar_select %p474, %s471, 1
      %s476 = smul.addr %s473, 2
      %s477 = sadd.s32 %s475, %s476
      %s478 = scalar_lea.vmem %s3, %s477
      // Predicated region
      $region29: #{a_call__.1} parent=27 // pred_check
        %p479 = pneg %p101
      $region30: #{a_call__.1} parent=27 // pred_check_branch
        %481 = sbr.rel (%p479) target = $region32
      $region31: #{a_call__.1} parent=27 // pred_region
        %s482 = smul.u32 2, %s20
      $region32: #{a_call__.1} parent=27 // pred_fallthru
        _
      // Predicated region
      $region33: #{a_call__.1} parent=27 // pred_check
        %p483 = pneg %p129
      $region34: #{a_call__.1} parent=27 // pred_check_branch
        %485 = sbr.rel (%p483) target = $region36
      $region35: #{a_call__.1} parent=27 // pred_region
        %s486 = smul.u32 2, %s20
      $region36: #{a_call__.1} parent=27 // pred_fallthru
        _
    $region28: #{a_call__.1} parent=5 // pred_fallthru
      _
    %p487 = scmp.le.s32.totalorder 2, %s10
    // Predicated region
    $region37: #{a_call__.1} parent=5 // pred_check
      %p488 = pneg %p487
    $region38: #{a_call__.1} parent=5 // pred_check_branch
      %490 = sbr.rel (%p488) target = $region40
    $region39: #{a_call__.1} parent=5 // pred_region
      %s491 = ssub.s32 %s10, 2
      // Predicated region
      $region41: #{a_call__.1} parent=39 // pred_check
        %p492 = pneg %p107
      $region42: #{a_call__.1} parent=39 // pred_check_branch
        %494 = sbr.rel (%p492) target = $region44
      $region43: #{a_call__.1} parent=39 // pred_region
        %s495 = smul.u32 2, %s22
        %p496 = scmp.lt.s32.totalorder %s21, 1
        %s497 = scalar_select %p496, %s21, 1
        %p498 = scmp.lt.s32.totalorder %s495, 1
        %s499 = scalar_select %p498, %s495, 1
        %s500 = smul.addr %s497, 2
        %s501 = sadd.s32 %s499, %s500
        %s502 = scalar_lea.vmem %s2, %s501
      $region44: #{a_call__.1} parent=39 // pred_fallthru
        _
      // Predicated region
      $region45: #{a_call__.1} parent=39 // pred_check
        %p503 = pneg %p135
      $region46: #{a_call__.1} parent=39 // pred_check_branch
        %505 = sbr.rel (%p503) target = $region48
      $region47: #{a_call__.1} parent=39 // pred_region
        %s506 = smul.u32 2, %s22
        %p507 = scmp.lt.s32.totalorder %s21, 1
        %s508 = scalar_select %p507, %s21, 1
        %p509 = scmp.lt.s32.totalorder %s506, 1
        %s510 = scalar_select %p509, %s506, 1
        %s511 = smul.addr %s508, 2
        %s512 = sadd.s32 %s510, %s511
        %s513 = scalar_lea.vmem %s3, %s512
      $region48: #{a_call__.1} parent=39 // pred_fallthru
        _
    $region40: #{a_call__.1} parent=5 // pred_fallthru
      _
  $region6: #{a_call__.1} parent=0 // loop_footer
    %s14 = sadd.s32 1, %s10
  $region7: #{a_call__.1} parent=0 // loop_footer_branch
    %9 = sbr.rel target = $region3
  $region8: #{a_call__.1} parent=0 // loop_exit
    _

// kernel: lt.0
$region0: #{lt.0}
  #allocation0 [shape = 's32[1]{0}', space=sflag, size = 0x4, scoped, tag = 'scoped memory for lt.0']
  %s0 = inlined_call_operand.<no memory space> [shape: s32[], index: 0, kind: input, shape index: {}]
  %s1 = inlined_call_operand.vmem [shape: s32[2,256], index: 1, kind: output, shape index: {}]
  %v2 = vstv %s0
  %3 = vst [vmem:[%s1] sm:$0x3] %v2
  %s4 = scalar_lea.vmem %s1, 2
  %5 = vst [vmem:[%s4] sm:$0x3] %v2

</llo_original>
